<compile_context>
chip_gen: v7x
topology: tpu7x:2x2x1
jax: 0.10.0
libtpu: 0.0.40
codegen_flags: <defaults>
</compile_context>

<pallas_src>
import functools

import jax
import jax.numpy as jnp
import numpy as np
from jax.experimental import pallas as pl
from jax.experimental.pallas import tpu as pltpu


_NEG_LOGIT_PAD = -100.0   # sigmoid(-100) == 0 in f32 -> padded focal == 0 exactly


def _round_up(x: int, m: int) -> int:
    return (x + m - 1) // m * m


def _static_pow(x, gamma: float):
    """x ** gamma with gamma a *static* Python float.

    Small integer gammas (the common gamma=2 case) become VPU multiplies
    instead of pow == exp(g*log(x)) (2 EUP ops / element).
    """
    g = float(gamma)
    if g == 0.0:
        return jnp.ones_like(x)
    if g == 1.0:
        return x
    if g == 2.0:
        return x * x
    if g == 3.0:
        return x * x * x
    if g == 4.0:
        x2 = x * x
        return x2 * x2
    return jnp.power(jnp.maximum(x, 1e-30), g)


def _focal_dice_kernel(x_ref, t_ref, *out_refs, write_focal, focal_weight,
                       focal_alpha, focal_gamma, dice_gamma, eps,
                       label_smoothing):
    """One (8, S_TILE) row-block x spatial-tile step.

    Outputs: [focal_map?] + per-row lane-reduced tp / fn / fp [+ focal sum]
    accumulated directly into tiny (1, 8, 1) f32 output blocks that stay
    VMEM-resident across the innermost ("arbitrary") spatial grid axis.
    """
    if write_focal:
        focal_ref, tp_ref, fn_ref, fp_ref = out_refs
        fs_ref = None
    else:
        tp_ref, fn_ref, fp_ref, fs_ref = out_refs

    s = pl.program_id(2)

    @pl.when(s == 0)
    def _init():
        tp_ref[...] = jnp.zeros_like(tp_ref)
        fn_ref[...] = jnp.zeros_like(fn_ref)
        fp_ref[...] = jnp.zeros_like(fp_ref)
        if fs_ref is not None:
            fs_ref[...] = jnp.zeros_like(fs_ref)

    # All math in f32 (v5e VPU/EUP have no bf16 path); inputs upcast on load.
    x = x_ref[...].astype(jnp.float32)            # (8, S_TILE) logits
    t = t_ref[...].astype(jnp.float32)            # (8, S_TILE) targets

    # Shared sigmoid / BCE pieces: one exp + one log + one reciprocal / elem.
    z = jnp.exp(-jnp.abs(x))                      # EUP
    one_plus_z = 1.0 + z
    log1p_z = jnp.log(one_plus_z)                 # EUP
    inv = pl.reciprocal(one_plus_z, approx=True)  # EUP
    p = jnp.where(x >= 0.0, inv, z * inv)         # sigmoid(x)
    one_minus_p = 1.0 - p

    # ---- focal loss (focal_weight folded into the alpha constant select) ----
    if label_smoothing > 0.0:
        t_f = t * (1.0 - label_smoothing) + 0.5 * label_smoothing
    else:
        t_f = t
    # numerically stable BCE-with-logits: max(x,0) - x*t + log(1 + exp(-|x|))
    bce = jnp.maximum(x, 0.0) - x * t_f + log1p_z
    pos = t_f >= 0.5
    p_t = jnp.where(pos, p, one_minus_p)
    mod = _static_pow(1.0 - p_t, focal_gamma)
    if focal_alpha is None:
        focal = focal_weight * (mod * bce)
    else:
        w_t = jnp.where(pos, focal_weight * focal_alpha,
                        focal_weight * (1.0 - focal_alpha))
        focal = w_t * mod * bce
    if write_focal:
        focal_ref[...] = focal.astype(focal_ref.dtype)

    # ---- Dice++ partials: one multiply + two subtracts for the 3 bases ----
    pc = jnp.clip(p, eps, 1.0 - eps)
    tc = jnp.clip(t, eps, 1.0 - eps)
    tp_term = tc * pc                                  # tc * pc
    fn_term = _static_pow(tc - tp_term, dice_gamma)    # (tc * (1 - pc)) ** g
    fp_term = _static_pow(pc - tp_term, dice_gamma)    # ((1 - tc) * pc) ** g

    # Lane-reduce once per step, accumulate into the resident (1, 8, 1) blocks.
    tp_ref[0] += jnp.sum(tp_term, axis=-1, keepdims=True)
    fn_ref[0] += jnp.sum(fn_term, axis=-1, keepdims=True)
    fp_ref[0] += jnp.sum(fp_term, axis=-1, keepdims=True)
    if fs_ref is not None:
        fs_ref[0] += jnp.sum(focal, axis=-1, keepdims=True)


def focal_dice_plus_loss(pred, target, *,
                         focal_weight=0.6, dice_weight=0.4,
                         focal_alpha=0.25, focal_gamma=2.0,
                         dice_gamma=2.0, epsilon=1e-7,
                         reduction="none", pos_weight=None,
                         label_smoothing=0.0,
                         max_s_tile=None, cast_target_bf16=True):
    """Pallas equivalent of FocalDicePlusLoss.forward ('none'/'mean'/'sum')."""
    if pos_weight is not None:
        # TODO(synk): per-class pos_weight in the BCE term is not implemented.
        raise NotImplementedError("pos_weight is not supported by the Pallas kernel")
    assert pred.shape == target.shape, (pred.shape, target.shape)

    B, C = int(pred.shape[0]), int(pred.shape[1])
    spatial = tuple(int(d) for d in pred.shape[2:])
    S = 1
    for d in spatial:
        S *= d
    BC = B * C
    R = 8                                  # sublane-full row tile (B*C folded)
    BC_pad = _round_up(BC, R)
    write_focal = (reduction == "none")

    # Targets stream as bf16 (binary / label-smoothed targets are exact) to
    # cut HBM traffic; v5e is HBM-bound for this kernel.
    t_dtype = jnp.bfloat16 if cast_target_bf16 else pred.dtype
    bx = jnp.dtype(pred.dtype).itemsize
    bt = jnp.dtype(t_dtype).itemsize
    bo = bx if write_focal else 0

    # Spatial tile from a VMEM budget: double-buffered in/out blocks plus
    # ~20 live whole-block f32 temporaries, kept under the 48 MiB limit
    # (inside v7x's 64 MiB physical VMEM) with headroom.
    vmem_budget = 32 * 1024 * 1024
    per_col = R * (2 * (bx + bt + bo) + 20 * 4)
    s_cap = 65536 if max_s_tile is None else int(max_s_tile)
    s_tile = min((vmem_budget // per_col) // 128 * 128,
                 max(128, (s_cap // 128) * 128),
                 _round_up(S, 128))
    s_tile = max(s_tile, 128)

    n_s_total = (S + s_tile - 1) // s_tile
    # 2-way "parallel" split of the spatial axis for v7x megacore balance.
    n_split = 2 if n_s_total >= 2 else 1
    n_s_total = _round_up(n_s_total, n_split)
    s_pad = n_s_total * s_tile
    n_s = n_s_total // n_split
    n_r = BC_pad // R

    x = pred.reshape(BC, S)
    t = target.astype(t_dtype).reshape(BC, S)
    if BC_pad != BC or s_pad != S:
        # Pad pred with a large negative logit and target with 0 so padded
        # elements add exactly 0 focal loss and only ~eps^2 to the Dice sums
        # -> no in-kernel tail mask needed.
        x = jnp.pad(x, ((0, BC_pad - BC), (0, s_pad - S)),
                    constant_values=_NEG_LOGIT_PAD)
        t = jnp.pad(t, ((0, BC_pad - BC), (0, s_pad - S)), constant_values=0.0)

    data_spec = pl.BlockSpec((R, s_tile), lambda r, p, s: (r, p * n_s + s))
    stat_spec = pl.BlockSpec((1, R, 1), lambda r, p, s: (p, r, 0))
    stat_shape = jax.ShapeDtypeStruct((n_split, BC_pad, 1), jnp.float32)

    out_shapes, out_specs = [], []
    if write_focal:
        out_shapes.append(jax.ShapeDtypeStruct((BC_pad, s_pad), pred.dtype))
        out_specs.append(data_spec)
    n_stats = 3 if write_focal else 4          # tp, fn, fp [, focal-sum]
    out_shapes += [stat_shape] * n_stats
    out_specs += [stat_spec] * n_stats

    kernel = functools.partial(
        _focal_dice_kernel,
        write_focal=write_focal,
        focal_weight=float(focal_weight),
        focal_alpha=None if focal_alpha is None else float(focal_alpha),
        focal_gamma=float(focal_gamma), dice_gamma=float(dice_gamma),
        eps=float(epsilon), label_smoothing=float(label_smoothing))

    outs = pl.pallas_call(
        kernel,
        out_shape=tuple(out_shapes),
        grid_spec=pltpu.PrefetchScalarGridSpec(
            num_scalar_prefetch=0,
            grid=(n_r, n_split, n_s),
            in_specs=[data_spec, data_spec],
            out_specs=tuple(out_specs)),
        compiler_params=pltpu.CompilerParams(
            dimension_semantics=("parallel", "parallel", "arbitrary"),
            vmem_limit_bytes=48 * 1024 * 1024),
    )(x, t)

    if write_focal:
        focal_map = outs[0]
        tp_o, fn_o, fp_o = outs[1:]
        fs_o = None
    else:
        tp_o, fn_o, fp_o, fs_o = outs

    def _finish(o):  # sum the spatial-split partitions, drop padded rows
        return o.sum(axis=0)[:BC, 0]                         # (BC,) f32

    tp = _finish(tp_o)
    fn = _finish(fn_o)
    fp = _finish(fp_o)
    dice_score = (2.0 * tp + epsilon) / (2.0 * tp + fn + fp + epsilon)
    dice_loss = 1.0 - dice_score                             # (BC,) f32

    if reduction in ("mean", "sum"):
        # focal_weight is already folded into the in-kernel focal sums.
        total = _finish(fs_o).sum() + dice_weight * dice_loss.sum() * float(S)
        if reduction == "mean":
            total = total / float(BC * S)
        return total.astype(pred.dtype)

    dice_term = (dice_weight * dice_loss).astype(pred.dtype)  # (BC,)
    combined = focal_map[:BC, :S] + dice_term[:, None]
    return combined.reshape((B, C) + spatial)


def _reference(pred, target, focal_weight=0.6, dice_weight=0.4,
               focal_alpha=0.25, focal_gamma=2.0, dice_gamma=2.0,
               epsilon=1e-7, label_smoothing=0.0):
    """Pure-JAX mirror of the PyTorch module (reduction='none')."""
    x = pred.astype(jnp.float32)
    t_raw = target.astype(jnp.float32)

    # Focal
    t = t_raw
    if label_smoothing > 0.0:
        t = t * (1.0 - label_smoothing) + 0.5 * label_smoothing
    bce = jnp.maximum(x, 0.0) - x * t + jnp.log1p(jnp.exp(-jnp.abs(x)))
    p = jax.nn.sigmoid(x)
    p_t = jnp.where(t >= 0.5, p, 1.0 - p)
    alpha_t = jnp.where(t >= 0.5, focal_alpha, 1.0 - focal_alpha)
    focal = alpha_t * (1.0 - p_t) ** focal_gamma * bce

    # Dice++
    pc = jnp.clip(p, epsilon, 1.0 - epsilon)
    tc = jnp.clip(t_raw, epsilon, 1.0 - epsilon)
    axes = tuple(range(2, x.ndim))
    tp = jnp.sum(tc * pc, axis=axes)
    fn = jnp.sum((tc * (1.0 - pc)) ** dice_gamma, axis=axes)
    fp = jnp.sum(((1.0 - tc) * pc) ** dice_gamma, axis=axes)
    dice_score = (2.0 * tp + epsilon) / (2.0 * tp + fn + fp + epsilon)
    dice_loss = 1.0 - dice_score
    dice_map = dice_loss.reshape(dice_loss.shape + (1,) * len(axes))
    return focal_weight * focal + dice_weight * dice_map


if __name__ == "__main__":
    key = jax.random.PRNGKey(0)
    k1, k2, k3, k4 = jax.random.split(key, 4)

    # Case 1: 'none' reduction, small tile forced so the multi-step / 2-way
    # spatial-split accumulation path is exercised (production uses auto tile).
    B, C, H, W = 2, 4, 16, 16
    pred = jax.random.normal(k1, (B, C, H, W), dtype=jnp.float32) * 2.0
    target = jax.random.bernoulli(k2, 0.3, (B, C, H, W)).astype(jnp.float32)

    out = focal_dice_plus_loss(pred, target, max_s_tile=128)
    out = jax.block_until_ready(out)
    ref = _reference(pred, target)
    np.testing.assert_allclose(np.asarray(out), np.asarray(ref),
                               rtol=1e-2, atol=1e-2)

    # Case 1b: 'mean' reduction fast path (no focal-map output at all).
    out_mean = focal_dice_plus_loss(pred, target, reduction="mean",
                                    max_s_tile=128)
    out_mean = jax.block_until_ready(out_mean)
    np.testing.assert_allclose(np.asarray(out_mean), np.asarray(ref.mean()),
                               rtol=1e-2, atol=1e-2)

    # Case 2: odd 3-D spatial shape -> row + spatial padding, auto tile size.
    B2, C2 = 1, 3
    pred2 = jax.random.normal(k3, (B2, C2, 5, 7, 11), dtype=jnp.float32)
    target2 = jax.random.bernoulli(k4, 0.4, (B2, C2, 5, 7, 11)).astype(jnp.float32)

    out2 = focal_dice_plus_loss(pred2, target2)
    out2 = jax.block_until_ready(out2)
    ref2 = _reference(pred2, target2)
    np.testing.assert_allclose(np.asarray(out2), np.asarray(ref2),
                               rtol=1e-2, atol=1e-2)

    print("KERNEL_OK")
</pallas_src>

<mosaic_0001>
module attributes {stable_mosaic.version = 11 : i64} {
  func.func @_focal_dice_kernel(%arg0: i32, %arg1: i32, %arg2: i32, %arg3: memref<8x128xf32, #tpu.memory_space<vmem>>, %arg4: memref<8x128xbf16, #tpu.memory_space<vmem>>, %arg5: memref<8x128xf32, #tpu.memory_space<vmem>>, %arg6: memref<1x8x1xf32, #tpu.memory_space<vmem>>, %arg7: memref<1x8x1xf32, #tpu.memory_space<vmem>>, %arg8: memref<1x8x1xf32, #tpu.memory_space<vmem>>) attributes {dimension_semantics = [#tpu.dimension_semantics<parallel>, #tpu.dimension_semantics<parallel>, #tpu.dimension_semantics<arbitrary>], iteration_bounds = array<i64: 1, 2, 1>, scalar_prefetch = 0 : i64, scratch_operands = 0 : i64, tpu.core_type = #tpu.core_type<tc>, window_params = [{transform_indices = @transform_0, window_bounds = array<i64: 8, 128>}, {transform_indices = @transform_1, window_bounds = array<i64: 8, 128>}, {transform_indices = @transform_2, window_bounds = array<i64: 8, 128>}, {transform_indices = @transform_3, window_bounds = array<i64: 1, 8, 1>}, {transform_indices = @transform_4, window_bounds = array<i64: 1, 8, 1>}, {transform_indices = @transform_5, window_bounds = array<i64: 1, 8, 1>}]} {
    %c0_i32 = arith.constant 0 : i32
    %0 = arith.cmpi eq, %arg2, %c0_i32 : i32
    %1 = arith.extui %0 : i1 to i32
    %c0_i32_0 = arith.constant 0 : i32
    %2 = arith.cmpi ne, %1, %c0_i32_0 : i32
    scf.if %2 {
      %cst_39 = arith.constant 0.000000e+00 : f32
      %74 = vector.broadcast %cst_39 : f32 to vector<1x8x1xf32>
      %c0_40 = arith.constant 0 : index
      %c0_41 = arith.constant 0 : index
      %c0_42 = arith.constant 0 : index
      %75 = vector.load %arg6[%c0_40, %c0_41, %c0_42] : memref<1x8x1xf32, #tpu.memory_space<vmem>>, vector<1x8x1xf32>
      tpu.vector_store %arg6[%c0_40, %c0_41, %c0_42], %74 {strides = array<i32>} : memref<1x8x1xf32, #tpu.memory_space<vmem>>, vector<1x8x1xf32>,
      %cst_43 = arith.constant 0.000000e+00 : f32
      %76 = vector.broadcast %cst_43 : f32 to vector<1x8x1xf32>
      %c0_44 = arith.constant 0 : index
      %c0_45 = arith.constant 0 : index
      %c0_46 = arith.constant 0 : index
      %77 = vector.load %arg7[%c0_44, %c0_45, %c0_46] : memref<1x8x1xf32, #tpu.memory_space<vmem>>, vector<1x8x1xf32>
      tpu.vector_store %arg7[%c0_44, %c0_45, %c0_46], %76 {strides = array<i32>} : memref<1x8x1xf32, #tpu.memory_space<vmem>>, vector<1x8x1xf32>,
      %cst_47 = arith.constant 0.000000e+00 : f32
      %78 = vector.broadcast %cst_47 : f32 to vector<1x8x1xf32>
      %c0_48 = arith.constant 0 : index
      %c0_49 = arith.constant 0 : index
      %c0_50 = arith.constant 0 : index
      %79 = vector.load %arg8[%c0_48, %c0_49, %c0_50] : memref<1x8x1xf32, #tpu.memory_space<vmem>>, vector<1x8x1xf32>
      tpu.vector_store %arg8[%c0_48, %c0_49, %c0_50], %78 {strides = array<i32>} : memref<1x8x1xf32, #tpu.memory_space<vmem>>, vector<1x8x1xf32>,
    } else {
    }
    %c0 = arith.constant 0 : index
    %c0_1 = arith.constant 0 : index
    %3 = vector.load %arg3[%c0, %c0_1] : memref<8x128xf32, #tpu.memory_space<vmem>>, vector<8x128xf32>
    %c0_2 = arith.constant 0 : index
    %c0_3 = arith.constant 0 : index
    %4 = vector.load %arg4[%c0_2, %c0_3] : memref<8x128xbf16, #tpu.memory_space<vmem>>, vector<8x128xbf16>
    %5 = arith.extf %4 : vector<8x128xbf16> to vector<8x128xf32>
    %6 = math.absf %3 : vector<8x128xf32>
    %cst = arith.constant 0.000000e+00 : f32
    %7 = vector.broadcast %cst : f32 to vector<8x128xf32>
    %8 = arith.subf %7, %6 : vector<8x128xf32>
    %9 = math.exp %8 : vector<8x128xf32>
    %cst_4 = arith.constant 1.000000e+00 : f32
    %10 = vector.broadcast %cst_4 : f32 to vector<8x128xf32>
    %11 = arith.addf %10, %9 : vector<8x128xf32>
    %12 = math.log %11 : vector<8x128xf32>
    %13 = tpu.reciprocal %11 {approx = true} : vector<8x128xf32> -> vector<8x128xf32>
    %cst_5 = arith.constant 0.000000e+00 : f32
    %14 = vector.broadcast %cst_5 : f32 to vector<8x128xf32>
    %15 = arith.cmpf oge, %3, %14 : vector<8x128xf32>
    %16 = arith.mulf %9, %13 : vector<8x128xf32>
    %17 = arith.select %15, %13, %16 : vector<8x128xi1>, vector<8x128xf32>
    %cst_6 = arith.constant 1.000000e+00 : f32
    %18 = vector.broadcast %cst_6 : f32 to vector<8x128xf32>
    %19 = arith.subf %18, %17 : vector<8x128xf32>
    %cst_7 = arith.constant 0.000000e+00 : f32
    %20 = vector.broadcast %cst_7 : f32 to vector<8x128xf32>
    %21 = arith.maximumf %3, %20 : vector<8x128xf32>
    %22 = arith.mulf %3, %5 : vector<8x128xf32>
    %23 = arith.subf %21, %22 : vector<8x128xf32>
    %24 = arith.addf %23, %12 : vector<8x128xf32>
    %cst_8 = arith.constant 5.000000e-01 : f32
    %25 = vector.broadcast %cst_8 : f32 to vector<8x128xf32>
    %26 = arith.cmpf oge, %5, %25 : vector<8x128xf32>
    %27 = arith.select %26, %17, %19 : vector<8x128xi1>, vector<8x128xf32>
    %cst_9 = arith.constant 1.000000e+00 : f32
    %28 = vector.broadcast %cst_9 : f32 to vector<8x128xf32>
    %29 = arith.subf %28, %27 : vector<8x128xf32>
    %30 = arith.mulf %29, %29 : vector<8x128xf32>
    %cst_10 = arith.constant 1.500000e-01 : f32
    %cst_11 = arith.constant 4.500000e-01 : f32
    %31 = vector.broadcast %cst_10 : f32 to vector<8x128xf32>
    %32 = vector.broadcast %cst_11 : f32 to vector<8x128xf32>
    %33 = arith.select %26, %31, %32 : vector<8x128xi1>, vector<8x128xf32>
    %34 = arith.mulf %33, %30 : vector<8x128xf32>
    %35 = arith.mulf %34, %24 : vector<8x128xf32>
    %c0_12 = arith.constant 0 : index
    %c0_13 = arith.constant 0 : index
    %36 = vector.load %arg5[%c0_12, %c0_13] : memref<8x128xf32, #tpu.memory_space<vmem>>, vector<8x128xf32>
    tpu.vector_store %arg5[%c0_12, %c0_13], %35 {strides = array<i32>} : memref<8x128xf32, #tpu.memory_space<vmem>>, vector<8x128xf32>,
    %cst_14 = arith.constant 1.000000e-07 : f32
    %cst_15 = arith.constant 0.99999988 : f32
    %37 = vector.broadcast %cst_14 : f32 to vector<8x128xf32>
    %38 = arith.maximumf %37, %17 : vector<8x128xf32>
    %39 = vector.broadcast %cst_15 : f32 to vector<8x128xf32>
    %40 = arith.minimumf %39, %38 : vector<8x128xf32>
    %cst_16 = arith.constant 1.000000e-07 : f32
    %cst_17 = arith.constant 0.99999988 : f32
    %41 = vector.broadcast %cst_16 : f32 to vector<8x128xf32>
    %42 = arith.maximumf %41, %5 : vector<8x128xf32>
    %43 = vector.broadcast %cst_17 : f32 to vector<8x128xf32>
    %44 = arith.minimumf %43, %42 : vector<8x128xf32>
    %45 = arith.mulf %44, %40 : vector<8x128xf32>
    %46 = arith.subf %44, %45 : vector<8x128xf32>
    %47 = arith.mulf %46, %46 : vector<8x128xf32>
    %48 = arith.subf %40, %45 : vector<8x128xf32>
    %49 = arith.mulf %48, %48 : vector<8x128xf32>
    %c0_18 = arith.constant 0 : index
    %c0_19 = arith.constant 0 : index
    %c0_20 = arith.constant 0 : index
    %50 = vector.load %arg6[%c0_18, %c0_19, %c0_20] : memref<1x8x1xf32, #tpu.memory_space<vmem>>, vector<1x8x1xf32>
    %51 = vector.shape_cast %50 : vector<1x8x1xf32> to vector<8x1xf32>
    %cst_21 = arith.constant dense<0.000000e+00> : vector<8xf32>
    %52 = vector.multi_reduction <add>, %45, %cst_21 [1] : vector<8x128xf32> to vector<8xf32>
    %53 = vector.shape_cast %52 : vector<8xf32> to vector<8x1xf32>
    %54 = arith.addf %51, %53 : vector<8x1xf32>
    %c0_22 = arith.constant 0 : index
    %c0_23 = arith.constant 0 : index
    %c0_24 = arith.constant 0 : index
    %55 = vector.load %arg6[%c0_22, %c0_23, %c0_24] : memref<1x8x1xf32, #tpu.memory_space<vmem>>, vector<1x8x1xf32>
    %56 = vector.shape_cast %55 : vector<1x8x1xf32> to vector<8x1xf32>
    %57 = vector.shape_cast %54 : vector<8x1xf32> to vector<1x8x1xf32>
    tpu.vector_store %arg6[%c0_22, %c0_23, %c0_24], %57 {strides = array<i32>} : memref<1x8x1xf32, #tpu.memory_space<vmem>>, vector<1x8x1xf32>,
    %c0_25 = arith.constant 0 : index
    %c0_26 = arith.constant 0 : index
    %c0_27 = arith.constant 0 : index
    %58 = vector.load %arg7[%c0_25, %c0_26, %c0_27] : memref<1x8x1xf32, #tpu.memory_space<vmem>>, vector<1x8x1xf32>
    %59 = vector.shape_cast %58 : vector<1x8x1xf32> to vector<8x1xf32>
    %cst_28 = arith.constant dense<0.000000e+00> : vector<8xf32>
    %60 = vector.multi_reduction <add>, %47, %cst_28 [1] : vector<8x128xf32> to vector<8xf32>
    %61 = vector.shape_cast %60 : vector<8xf32> to vector<8x1xf32>
    %62 = arith.addf %59, %61 : vector<8x1xf32>
    %c0_29 = arith.constant 0 : index
    %c0_30 = arith.constant 0 : index
    %c0_31 = arith.constant 0 : index
    %63 = vector.load %arg7[%c0_29, %c0_30, %c0_31] : memref<1x8x1xf32, #tpu.memory_space<vmem>>, vector<1x8x1xf32>
    %64 = vector.shape_cast %63 : vector<1x8x1xf32> to vector<8x1xf32>
    %65 = vector.shape_cast %62 : vector<8x1xf32> to vector<1x8x1xf32>
    tpu.vector_store %arg7[%c0_29, %c0_30, %c0_31], %65 {strides = array<i32>} : memref<1x8x1xf32, #tpu.memory_space<vmem>>, vector<1x8x1xf32>,
    %c0_32 = arith.constant 0 : index
    %c0_33 = arith.constant 0 : index
    %c0_34 = arith.constant 0 : index
    %66 = vector.load %arg8[%c0_32, %c0_33, %c0_34] : memref<1x8x1xf32, #tpu.memory_space<vmem>>, vector<1x8x1xf32>
    %67 = vector.shape_cast %66 : vector<1x8x1xf32> to vector<8x1xf32>
    %cst_35 = arith.constant dense<0.000000e+00> : vector<8xf32>
    %68 = vector.multi_reduction <add>, %49, %cst_35 [1] : vector<8x128xf32> to vector<8xf32>
    %69 = vector.shape_cast %68 : vector<8xf32> to vector<8x1xf32>
    %70 = arith.addf %67, %69 : vector<8x1xf32>
    %c0_36 = arith.constant 0 : index
    %c0_37 = arith.constant 0 : index
    %c0_38 = arith.constant 0 : index
    %71 = vector.load %arg8[%c0_36, %c0_37, %c0_38] : memref<1x8x1xf32, #tpu.memory_space<vmem>>, vector<1x8x1xf32>
    %72 = vector.shape_cast %71 : vector<1x8x1xf32> to vector<8x1xf32>
    %73 = vector.shape_cast %70 : vector<8x1xf32> to vector<1x8x1xf32>
    tpu.vector_store %arg8[%c0_36, %c0_37, %c0_38], %73 {strides = array<i32>} : memref<1x8x1xf32, #tpu.memory_space<vmem>>, vector<1x8x1xf32>,
    return
  }
  func.func @transform_0(%arg0: i32, %arg1: i32, %arg2: i32) -> (i32, i32) {
    %c1_i32 = arith.constant 1 : i32
    %0 = arith.muli %arg1, %c1_i32 : i32
    %1 = arith.addi %0, %arg2 : i32
    %c0_i32 = arith.constant 0 : i32
    return %arg0, %1 : i32, i32
  }
  func.func @transform_1(%arg0: i32, %arg1: i32, %arg2: i32) -> (i32, i32) {
    %c1_i32 = arith.constant 1 : i32
    %0 = arith.muli %arg1, %c1_i32 : i32
    %1 = arith.addi %0, %arg2 : i32
    %c0_i32 = arith.constant 0 : i32
    return %arg0, %1 : i32, i32
  }
  func.func @transform_2(%arg0: i32, %arg1: i32, %arg2: i32) -> (i32, i32) {
    %c1_i32 = arith.constant 1 : i32
    %0 = arith.muli %arg1, %c1_i32 : i32
    %1 = arith.addi %0, %arg2 : i32
    %c0_i32 = arith.constant 0 : i32
    return %arg0, %1 : i32, i32
  }
  func.func @transform_3(%arg0: i32, %arg1: i32, %arg2: i32) -> (i32, i32, i32) {
    %c0_i32 = arith.constant 0 : i32
    %c0_i32_0 = arith.constant 0 : i32
    return %arg1, %arg0, %c0_i32 : i32, i32, i32
  }
  func.func @transform_4(%arg0: i32, %arg1: i32, %arg2: i32) -> (i32, i32, i32) {
    %c0_i32 = arith.constant 0 : i32
    %c0_i32_0 = arith.constant 0 : i32
    return %arg1, %arg0, %c0_i32 : i32, i32, i32
  }
  func.func @transform_5(%arg0: i32, %arg1: i32, %arg2: i32) -> (i32, i32, i32) {
    %c0_i32 = arith.constant 0 : i32
    %c0_i32_0 = arith.constant 0 : i32
    return %arg1, %arg0, %c0_i32 : i32, i32, i32
  }
}

</mosaic_0001>

<llo_original>
// kernel: tpu_custom_call.1
$region0: #{tpu_custom_call.1}
  #allocation0 [shape = 'u32[]', space=smem, size = 0x4, offset = 0x4, fixed_abs, tag = 'smem constant byte address 0x4 - core index']
  #allocation1 [shape = 'u32[144,128]{1,0:T(1,128)}', space=vmem, size = 0x12000, scoped, tag = 'internal scratch']
  %s0 = inlined_call_operand.hbm [shape: f32[8,256], index: 0, kind: input, shape index: {}]
  %s1 = inlined_call_operand.hbm [shape: bf16[8,256], index: 1, kind: input, shape index: {}]
  %s2 = inlined_call_operand.hbm [shape: f32[8,256], index: 2, kind: output, shape index: {0}]
  %s3 = inlined_call_operand.vmem [shape: f32[2,8,1], index: 3, kind: output, shape index: {1}]
  %s4 = inlined_call_operand.vmem [shape: f32[2,8,1], index: 4, kind: output, shape index: {2}]
  %s5 = inlined_call_operand.vmem [shape: f32[2,8,1], index: 5, kind: output, shape index: {3}]
  %6 = xla_tuple %s2, %s3, %s4, %s5
  %s7 = sld [smem:[#allocation0]]
  $region77: #{tpu_custom_call.1} parent=0
    _
  %s9 = ssub.s32 1, %s7
  %s10 = scalar_select 0, %s9, %s7
  $region1: #{tpu_custom_call.1} parent=0
    #allocation2 [shape = 'u8[8192]{0}', space=vmem, size = 0x2000, scoped, tag = 'input window, operand 0']
    #allocation3 [shape = 's32[2]{0}', space=sflag, size = 0x8, scoped, tag = 'scoped memory for tpu_custom_call.1']
    #allocation4 [shape = 's32[2]{0}', space=sflag, size = 0x8, scoped, tag = 'scoped memory for tpu_custom_call.1']
    #allocation5 [shape = 'u8[4096]{0}', space=vmem, size = 0x1000, scoped, tag = 'input window, operand 1']
    #allocation6 [shape = 's32[2]{0}', space=sflag, size = 0x8, scoped, tag = 'scoped memory for tpu_custom_call.1']
    #allocation7 [shape = 'u8[8192]{0}', space=vmem, size = 0x2000, scoped, tag = 'output window, operand 0']
    %11 = vsyncpa [#allocation3], 0
    %s12 = scalar_lea.sflag [#allocation3], 1
    %13 = vsyncpa %s12, 0
    %14 = vsyncpa [#allocation6], 0
    %s15 = scalar_lea.sflag [#allocation6], 1
    %16 = vsyncpa %s15, 0
    %17 = vsyncpa [#allocation4], 0
    %s18 = scalar_lea.sflag [#allocation4], 1
    %19 = vsyncpa %s18, 0
    loop: start=0, step=1, limit=4
    $region2: #{tpu_custom_call.1} parent=1 // loop_pre_header
      _
    $region3: #{tpu_custom_call.1} parent=1 // loop_header
      %s21 = sphi 0, %s25
      %p22 = scmp.ge.s32.totalorder %s21, 4
      %s28 = sphi 0, %s47
      %s29 = sphi 0, %s43
      %s30 = sphi 0, %s39
      %s31 = sphi 0, %s28
      %s32 = sphi 0, %s29
      %s33 = sphi 0, %s30
      %s34 = sphi 0, %s31
      %s35 = sphi 0, %s32
      %s36 = sphi 0, %s33
      %s54 = sphi 0, %s56
      %s57 = sphi 0, %s54
      %s58 = sphi 0, %s57
      %s74 = sphi 0, %s58
      %s84 = sphi 0, %s86
      %s87 = sphi 0, %s84
      %s88 = sphi 0, %s87
      %s104 = sphi 0, %s88
      %s114 = sphi 0, %s116
      %s117 = sphi 0, %s114
      %s118 = sphi 0, %s117
      %s134 = sphi 0, %s118
      %s142 = sphi 0, %s144
      %s145 = sphi 0, %s142
      %s146 = sphi 0, %s145
      %s162 = sphi 0, %s146
      %s170 = sphi 0, %s172
      %s173 = sphi 0, %s170
      %s174 = sphi 0, %s173
      %s190 = sphi 0, %s174
      %s198 = sphi 0, %s200
      %s201 = sphi 0, %s198
      %s202 = sphi 0, %s201
      %s218 = sphi 0, %s202
    $region4: #{tpu_custom_call.1} parent=1 // loop_header_branch
      %24 = sbr.rel (%p22) target = $region8
    $region5: #{tpu_custom_call.1} parent=1 // loop_body
      %s26 = ssub.s32 %s21, 1
      %s27 = ssub.s32 %s21, 2
      %s37 = sadd.s32 1, %s30
      %p38 = scmp.ge.s32.totalorder %s37, 1
      %s39 = scalar_select %p38, 0, %s37
      %s40 = sadd.s32 1, %s29
      %s41 = scalar_select %p38, %s40, %s29
      %p42 = scmp.ge.s32.totalorder %s41, 2
      %s43 = scalar_select %p42, 0, %s41
      %s44 = sadd.s32 1, %s28
      %s45 = scalar_select %p42, %s44, %s28
      %p46 = scmp.ge.s32.totalorder %s45, 1
      %s47 = scalar_select %p46, 0, %s45
      %s48 = sadd.s32 %s29, %s30
      %s49 = sadd.s32 %s43, %s39
      %s50 = ssub.s32 %s28, %s47
      %s51 = ssub.s32 %s48, %s49
      %s52 = sor.u32 %s50, %s51
      %p53 = scmp.eq.s32.totalorder %s52, 0
      %s55 = sadd.s32 %s54, 1
      %s56 = scalar_select %p53, %s54, %s55
      %p59 = pneg %p53
      %p60 = scmp.eq.s32.totalorder %s21, 1
      %p61 = por %p59, %p60
      %p62 = scmp.ne.s32.totalorder %s54, %s57
      %p63 = scmp.eq.s32.totalorder %s21, 0
      %p64 = por %p62, %p63
      %p65 = scmp.ne.s32.totalorder %s54, %s57
      %p66 = scmp.eq.s32.totalorder %s26, 1
      %p67 = por %p65, %p66
      %p68 = scmp.ne.s32.totalorder %s57, %s58
      %p69 = scmp.eq.s32.totalorder %s26, 0
      %p70 = por %p68, %p69
      %p71 = scmp.ne.s32.totalorder %s57, %s58
      %p72 = scmp.eq.s32.totalorder %s27, 1
      %p73 = por %p71, %p72
      %p75 = scmp.ne.s32.totalorder %s58, %s74
      %p76 = scmp.eq.s32.totalorder %s27, 0
      %p77 = por %p75, %p76
      %s78 = sadd.s32 %s29, %s30
      %s79 = sadd.s32 %s43, %s39
      %s80 = ssub.s32 %s28, %s47
      %s81 = ssub.s32 %s78, %s79
      %s82 = sor.u32 %s80, %s81
      %p83 = scmp.eq.s32.totalorder %s82, 0
      %s85 = sadd.s32 %s84, 1
      %s86 = scalar_select %p83, %s84, %s85
      %p89 = pneg %p83
      %p90 = scmp.eq.s32.totalorder %s21, 1
      %p91 = por %p89, %p90
      %p92 = scmp.ne.s32.totalorder %s84, %s87
      %p93 = scmp.eq.s32.totalorder %s21, 0
      %p94 = por %p92, %p93
      %p95 = scmp.ne.s32.totalorder %s84, %s87
      %p96 = scmp.eq.s32.totalorder %s26, 1
      %p97 = por %p95, %p96
      %p98 = scmp.ne.s32.totalorder %s87, %s88
      %p99 = scmp.eq.s32.totalorder %s26, 0
      %p100 = por %p98, %p99
      %p101 = scmp.ne.s32.totalorder %s87, %s88
      %p102 = scmp.eq.s32.totalorder %s27, 1
      %p103 = por %p101, %p102
      %p105 = scmp.ne.s32.totalorder %s88, %s104
      %p106 = scmp.eq.s32.totalorder %s27, 0
      %p107 = por %p105, %p106
      %s108 = sadd.s32 %s29, %s30
      %s109 = sadd.s32 %s43, %s39
      %s110 = ssub.s32 %s28, %s47
      %s111 = ssub.s32 %s108, %s109
      %s112 = sor.u32 %s110, %s111
      %p113 = scmp.eq.s32.totalorder %s112, 0
      %s115 = sadd.s32 %s114, 1
      %s116 = scalar_select %p113, %s114, %s115
      %p119 = pneg %p113
      %p120 = scmp.eq.s32.totalorder %s21, 1
      %p121 = por %p119, %p120
      %p122 = scmp.ne.s32.totalorder %s114, %s117
      %p123 = scmp.eq.s32.totalorder %s21, 0
      %p124 = por %p122, %p123
      %p125 = scmp.ne.s32.totalorder %s114, %s117
      %p126 = scmp.eq.s32.totalorder %s26, 1
      %p127 = por %p125, %p126
      %p128 = scmp.ne.s32.totalorder %s117, %s118
      %p129 = scmp.eq.s32.totalorder %s26, 0
      %p130 = por %p128, %p129
      %p131 = scmp.ne.s32.totalorder %s117, %s118
      %p132 = scmp.eq.s32.totalorder %s27, 1
      %p133 = por %p131, %p132
      %p135 = scmp.ne.s32.totalorder %s118, %s134
      %p136 = scmp.eq.s32.totalorder %s27, 0
      %p137 = por %p135, %p136
      %s138 = ssub.s32 %s29, %s43
      %s139 = ssub.s32 %s28, %s47
      %s140 = sor.u32 %s138, %s139
      %p141 = scmp.eq.s32.totalorder %s140, 0
      %s143 = sadd.s32 %s142, 1
      %s144 = scalar_select %p141, %s142, %s143
      %p147 = pneg %p141
      %p148 = scmp.eq.s32.totalorder %s21, 1
      %p149 = por %p147, %p148
      %p150 = scmp.ne.s32.totalorder %s142, %s145
      %p151 = scmp.eq.s32.totalorder %s21, 0
      %p152 = por %p150, %p151
      %p153 = scmp.ne.s32.totalorder %s142, %s145
      %p154 = scmp.eq.s32.totalorder %s26, 1
      %p155 = por %p153, %p154
      %p156 = scmp.ne.s32.totalorder %s145, %s146
      %p157 = scmp.eq.s32.totalorder %s26, 0
      %p158 = por %p156, %p157
      %p159 = scmp.ne.s32.totalorder %s145, %s146
      %p160 = scmp.eq.s32.totalorder %s27, 1
      %p161 = por %p159, %p160
      %p163 = scmp.ne.s32.totalorder %s146, %s162
      %p164 = scmp.eq.s32.totalorder %s27, 0
      %p165 = por %p163, %p164
      %s166 = ssub.s32 %s29, %s43
      %s167 = ssub.s32 %s28, %s47
      %s168 = sor.u32 %s166, %s167
      %p169 = scmp.eq.s32.totalorder %s168, 0
      %s171 = sadd.s32 %s170, 1
      %s172 = scalar_select %p169, %s170, %s171
      %p175 = pneg %p169
      %p176 = scmp.eq.s32.totalorder %s21, 1
      %p177 = por %p175, %p176
      %p178 = scmp.ne.s32.totalorder %s170, %s173
      %p179 = scmp.eq.s32.totalorder %s21, 0
      %p180 = por %p178, %p179
      %p181 = scmp.ne.s32.totalorder %s170, %s173
      %p182 = scmp.eq.s32.totalorder %s26, 1
      %p183 = por %p181, %p182
      %p184 = scmp.ne.s32.totalorder %s173, %s174
      %p185 = scmp.eq.s32.totalorder %s26, 0
      %p186 = por %p184, %p185
      %p187 = scmp.ne.s32.totalorder %s173, %s174
      %p188 = scmp.eq.s32.totalorder %s27, 1
      %p189 = por %p187, %p188
      %p191 = scmp.ne.s32.totalorder %s174, %s190
      %p192 = scmp.eq.s32.totalorder %s27, 0
      %p193 = por %p191, %p192
      %s194 = ssub.s32 %s29, %s43
      %s195 = ssub.s32 %s28, %s47
      %s196 = sor.u32 %s194, %s195
      %p197 = scmp.eq.s32.totalorder %s196, 0
      %s199 = sadd.s32 %s198, 1
      %s200 = scalar_select %p197, %s198, %s199
      %p203 = pneg %p197
      %p204 = scmp.eq.s32.totalorder %s21, 1
      %p205 = por %p203, %p204
      %p206 = scmp.ne.s32.totalorder %s198, %s201
      %p207 = scmp.eq.s32.totalorder %s21, 0
      %p208 = por %p206, %p207
      %p209 = scmp.ne.s32.totalorder %s198, %s201
      %p210 = scmp.eq.s32.totalorder %s26, 1
      %p211 = por %p209, %p210
      %p212 = scmp.ne.s32.totalorder %s201, %s202
      %p213 = scmp.eq.s32.totalorder %s26, 0
      %p214 = por %p212, %p213
      %p215 = scmp.ne.s32.totalorder %s201, %s202
      %p216 = scmp.eq.s32.totalorder %s27, 1
      %p217 = por %p215, %p216
      %p219 = scmp.ne.s32.totalorder %s202, %s218
      %p220 = scmp.eq.s32.totalorder %s27, 0
      %p221 = por %p219, %p220
      %p222 = scmp.le.s32.totalorder 1, %s21
      %p223 = scmp.lt.s32.totalorder %s21, 3
      %p224 = pnand %p222, %p223
      %p225 = pneg %p224
      // Predicated region
      $region9: #{tpu_custom_call.1} parent=5 // pred_check
        _
      $region10: #{tpu_custom_call.1} parent=5 // pred_check_branch
        %227 = sbr.rel (%p224) target = $region12
      $region11: #{tpu_custom_call.1} parent=5 // pred_region
        %s228 = ssub.s32 %s21, 1
      $region12: #{tpu_custom_call.1} parent=5 // pred_fallthru
        _
      %p229 = scmp.lt.s32.totalorder %s21, 2
      // Predicated region
      $region13: #{tpu_custom_call.1} parent=5 // pred_check
        %p230 = pneg %p229
      $region14: #{tpu_custom_call.1} parent=5 // pred_check_branch
        %232 = sbr.rel (%p230) target = $region16
      $region15: #{tpu_custom_call.1} parent=5 // pred_region
        // Predicated region
        $region17: #{tpu_custom_call.1} parent=15 // pred_check
          %p233 = pneg %p64
        $region18: #{tpu_custom_call.1} parent=15 // pred_check_branch
          %235 = sbr.rel (%p233) target = $region20
        $region19: #{tpu_custom_call.1} parent=15 // pred_region
          %s236 = sand.u32 %s54, 1
          %s237 = scalar_lea.sflag [#allocation3], %s236
          %s238 = sand.u32 %s54, 1
          %s239 = smul.addr %s238, 8
          %s240 = scalar_lea.vmem [#allocation2], %s239
          %s241 = sadd.s32 %s29, %s30
          %s243 = ssub.s32 128, 128
          %244 = vsyncadd %s237, %s243
          %s245 = smul.addr %s28, 2
          %s246 = sadd.s32 %s241, %s245
          %s247 = smul.addr %s246, 128
          %s248 = scalar_lea.hbm %s0, %s247
          %s250 = sshll.u32 %s240, 4
          %s251 = int_to_ptr.vmem [resolvable:$true] %s250
          %253 = dma.hbm_to_vmem [thread:$0]  %s248, 128, %s251, %s237
        $region20: #{tpu_custom_call.1} parent=15 // pred_fallthru
          _
        // Predicated region
        $region21: #{tpu_custom_call.1} parent=15 // pred_check
          %p254 = pneg %p94
        $region22: #{tpu_custom_call.1} parent=15 // pred_check_branch
          %256 = sbr.rel (%p254) target = $region24
        $region23: #{tpu_custom_call.1} parent=15 // pred_region
          %s257 = sand.u32 %s84, 1
          %s258 = scalar_lea.sflag [#allocation6], %s257
          %s259 = sand.u32 %s84, 1
          %s260 = smul.addr %s259, 4
          %s261 = scalar_lea.vmem [#allocation5], %s260
          %s262 = sadd.s32 %s29, %s30
          %s264 = ssub.s32 64, 64
          %265 = vsyncadd %s258, %s264
          %s266 = smul.addr %s28, 2
          %s267 = sadd.s32 %s262, %s266
          %s268 = smul.addr %s267, 64
          %s269 = scalar_lea.hbm %s1, %s268
          %s271 = sshll.u32 %s261, 4
          %s272 = int_to_ptr.vmem [resolvable:$true] %s271
          %274 = dma.hbm_to_vmem [thread:$0]  %s269, 64, %s272, %s258
        $region24: #{tpu_custom_call.1} parent=15 // pred_fallthru
          _
      $region16: #{tpu_custom_call.1} parent=5 // pred_fallthru
        _
      %p275 = scmp.le.s32.totalorder 1, %s21
      %p276 = scmp.lt.s32.totalorder %s21, 3
      %p277 = pnand %p275, %p276
      %p278 = pneg %p277
      // Predicated region
      $region25: #{tpu_custom_call.1} parent=5 // pred_check
        _
      $region26: #{tpu_custom_call.1} parent=5 // pred_check_branch
        %280 = sbr.rel (%p277) target = $region28
      $region27: #{tpu_custom_call.1} parent=5 // pred_region
        %s281 = ssub.s32 %s21, 1
        %s282 = sand.u32 %s57, 1
        %s283 = scalar_lea.sflag [#allocation3], %s282
        %s284 = sand.u32 %s57, 1
        %s285 = smul.addr %s284, 8
        %s286 = scalar_lea.vmem [#allocation2], %s285
        // Predicated region
        $region29: #{tpu_custom_call.1} parent=27 // pred_check
          %p287 = pneg %p70
        $region30: #{tpu_custom_call.1} parent=27 // pred_check_branch
          %289 = sbr.rel (%p287) target = $region32
        $region31: #{tpu_custom_call.1} parent=27 // pred_region
          %290 = dma.done %s283, 128
        $region32: #{tpu_custom_call.1} parent=27 // pred_fallthru
          _
        %s291 = sand.u32 %s87, 1
        %s292 = scalar_lea.sflag [#allocation6], %s291
        %s293 = sand.u32 %s87, 1
        %s294 = smul.addr %s293, 4
        %s295 = scalar_lea.vmem [#allocation5], %s294
        // Predicated region
        $region33: #{tpu_custom_call.1} parent=27 // pred_check
          %p296 = pneg %p100
        $region34: #{tpu_custom_call.1} parent=27 // pred_check_branch
          %298 = sbr.rel (%p296) target = $region36
        $region35: #{tpu_custom_call.1} parent=27 // pred_region
          %299 = dma.done %s292, 64
        $region36: #{tpu_custom_call.1} parent=27 // pred_fallthru
          _
        %s300 = sand.u32 %s57, 1
        %s301 = scalar_lea.sflag [#allocation3], %s300
        %s302 = sand.u32 %s57, 1
        %s303 = smul.addr %s302, 8
        %s304 = scalar_lea.vmem [#allocation2], %s303
        %p305 = pneg %p70
        %p306 = pneg %p67
        %s307 = sand.u32 %s87, 1
        %s308 = scalar_lea.sflag [#allocation6], %s307
        %s309 = sand.u32 %s87, 1
        %s310 = smul.addr %s309, 4
        %s311 = scalar_lea.vmem [#allocation5], %s310
        %p312 = pneg %p100
        %p313 = pneg %p97
        %p314 = pneg %p130
        %p315 = pneg %p127
        %s316 = sand.u32 %s117, 1
        %s317 = scalar_lea.sflag [#allocation4], %s316
        %s318 = sand.u32 %s117, 1
        %s319 = smul.addr %s318, 8
        %s320 = scalar_lea.vmem [#allocation7], %s319
        %p321 = pneg %p158
        %p322 = pneg %p155
        %p323 = scmp.lt.s32.totalorder %s32, 1
        %s324 = scalar_select %p323, %s32, 1
        %p325 = scmp.lt.s32.totalorder %s31, 0
        %s326 = scalar_select %p325, %s31, 0
        %s327 = sadd.s32 %s326, %s324
        %s328 = smul.addr %s327, 8
        %s329 = scalar_lea.vmem %s3, %s328
        %p330 = pneg %p186
        %p331 = pneg %p183
        %p332 = scmp.lt.s32.totalorder %s32, 1
        %s333 = scalar_select %p332, %s32, 1
        %p334 = scmp.lt.s32.totalorder %s31, 0
        %s335 = scalar_select %p334, %s31, 0
        %s336 = sadd.s32 %s335, %s333
        %s337 = smul.addr %s336, 8
        %s338 = scalar_lea.vmem %s4, %s337
        %p339 = pneg %p214
        %p340 = pneg %p211
        %p341 = scmp.lt.s32.totalorder %s32, 1
        %s342 = scalar_select %p341, %s32, 1
        %p343 = scmp.lt.s32.totalorder %s31, 0
        %s344 = scalar_select %p343, %s31, 0
        %s345 = sadd.s32 %s344, %s342
        %s346 = smul.addr %s345, 8
        %s347 = scalar_lea.vmem %s5, %s346
        %s348 = sadd.s32 %s32, %s33
        %s349 = sadd.s32 %s32, %s33
        %s350 = sadd.s32 %s32, %s33
        %p351 = scmp.lt.s32.totalorder %s32, 1
        %s352 = scalar_select %p351, %s32, 1
        %p353 = scmp.lt.s32.totalorder %s31, 0
        %s354 = scalar_select %p353, %s31, 0
        %s355 = sadd.s32 %s354, %s352
        %s356 = smul.addr %s355, 8
        %s357 = scalar_lea.vmem %s3, %s356
        %p358 = scmp.lt.s32.totalorder %s32, 1
        %s359 = scalar_select %p358, %s32, 1
        %p360 = scmp.lt.s32.totalorder %s31, 0
        %s361 = scalar_select %p360, %s31, 0
        %s362 = sadd.s32 %s361, %s359
        %s363 = smul.addr %s362, 8
        %s364 = scalar_lea.vmem %s4, %s363
        %p365 = scmp.lt.s32.totalorder %s32, 1
        %s366 = scalar_select %p365, %s32, 1
        %p367 = scmp.lt.s32.totalorder %s31, 0
        %s368 = scalar_select %p367, %s31, 0
        %s369 = sadd.s32 %s368, %s366
        %s370 = smul.addr %s369, 8
        %s371 = scalar_lea.vmem %s5, %s370
        %p372 = scmp.eq.s32.totalorder %s33, 0
        // Predicated region
        $region37: #{tpu_custom_call.1} parent=27 // pred_check
          %p373 = pneg %p372
        $region38: #{tpu_custom_call.1} parent=27 // pred_check_branch
          %375 = sbr.rel (%p373) target = $region40
        $region39: #{tpu_custom_call.1} parent=27 // pred_region
          %vm376 = vcmask 7168
          %377 = vst.msk [vmem:[%s357] sm:$0xff] %vm376, 0.0
          %378 = vst.msk [vmem:[%s364] sm:$0xff] %vm376, 0.0
          %379 = vst.msk [vmem:[%s371] sm:$0xff] %vm376, 0.0
        $region40: #{tpu_custom_call.1} parent=27 // pred_fallthru
          _
        %v380 = vld [vmem:[%s286] sm:$0xff]
        %v381 = vld [vmem:[%s295] sm:$0xf]
        %v382 = vunpack.c.l.bf16 %v381
        %v383 = vand.u32 2147483647, %v380
        %v384 = vsub.f32 0.0, %v383
        %v385 = vmul.f32 %v384, 1.442695
        %v386 = vpow.pop %v385
        %v387 = vadd.f32 %v386, 1.0
        %v388 = vlog2.pop %v387
        %v389 = vmul.f32 %v388, 0.6931472
        %v390 = vrcp.pop %v387
        %vm391 = vcmp.ge.f32.partialorder %v380, 0.0
        %v392 = vmul.f32 %v386, %v390
        %v393 = vsel %vm391, %v390, %v392
        %v394 = vsub.f32 1.0, %v393
        %v395 = vmax.f32 %v380, 0.0
        %v396 = vmul.f32 %v380, %v382
        %v397 = vsub.f32 %v395, %v396
        %v398 = vadd.f32 %v397, %v389
        %vm399 = vcmp.ge.f32.partialorder %v382, 0.5
        %v400 = vsel %vm399, %v393, %v394
        %v401 = vsub.f32 1.0, %v400
        %v402 = vmul.f32 %v401, %v401
        %v403 = vsel %vm399, 0.15, 0.45
        %v404 = vmul.f32 %v403, %v402
        %v405 = vmul.f32 %v404, %v398
        %406 = vst [vmem:[%s320] sm:$0xff] %v405
        %v407 = vmax.f32 %v393, 1e-07
        %v408 = vmin.f32 %v407, 0.9999999
        %v409 = vmax.f32 %v382, 1e-07
        %v410 = vmin.f32 %v409, 0.9999999
        %v411 = vmul.f32 %v410, %v408
        %v412 = vsub.f32 %v410, %v411
        %v413 = vmul.f32 %v412, %v412
        %v414 = vsub.f32 %v408, %v411
        %v415 = vmul.f32 %v414, %v414
        %v416 = vld [vmem:[%s357] sm:$0xff]
        %417 = vadd.xlane.f32.xlu0 %v411
        %v418 = vpop.xlane.xlu0 %417
        %v419 = vadd.f32 %v416, %v418
        %vm420 = vcmask 7168
        %421 = vst.msk [vmem:[%s357] sm:$0xff] %vm420, %v419
        %v422 = vld [vmem:[%s364] sm:$0xff]
        %423 = vadd.xlane.f32.xlu0 %v413
        %v424 = vpop.xlane.xlu0 %423
        %v425 = vadd.f32 %v422, %v424
        %426 = vst.msk [vmem:[%s364] sm:$0xff] %vm420, %v425
        %v427 = vld [vmem:[%s371] sm:$0xff]
        %428 = vadd.xlane.f32.xlu0 %v415
        %v429 = vpop.xlane.xlu0 %428
        %v430 = vadd.f32 %v427, %v429
        %431 = vst.msk [vmem:[%s371] sm:$0xff] %vm420, %v430
        %s432 = sand.u32 %s117, 1
        %s433 = scalar_lea.sflag [#allocation4], %s432
        %s434 = sand.u32 %s117, 1
        %s435 = smul.addr %s434, 8
        %s436 = scalar_lea.vmem [#allocation7], %s435
        %p437 = scmp.lt.s32.totalorder %s32, 1
        %s438 = scalar_select %p437, %s32, 1
        %p439 = scmp.lt.s32.totalorder %s31, 0
        %s440 = scalar_select %p439, %s31, 0
        %s441 = sadd.s32 %s440, %s438
        %s442 = smul.addr %s441, 8
        %s443 = scalar_lea.vmem %s3, %s442
        %p444 = scmp.lt.s32.totalorder %s32, 1
        %s445 = scalar_select %p444, %s32, 1
        %p446 = scmp.lt.s32.totalorder %s31, 0
        %s447 = scalar_select %p446, %s31, 0
        %s448 = sadd.s32 %s447, %s445
        %s449 = smul.addr %s448, 8
        %s450 = scalar_lea.vmem %s4, %s449
        %p451 = scmp.lt.s32.totalorder %s32, 1
        %s452 = scalar_select %p451, %s32, 1
        %p453 = scmp.lt.s32.totalorder %s31, 0
        %s454 = scalar_select %p453, %s31, 0
        %s455 = sadd.s32 %s454, %s452
        %s456 = smul.addr %s455, 8
        %s457 = scalar_lea.vmem %s5, %s456
        // Predicated region
        $region41: #{tpu_custom_call.1} parent=27 // pred_check
          %p458 = pneg %p127
        $region42: #{tpu_custom_call.1} parent=27 // pred_check_branch
          %460 = sbr.rel (%p458) target = $region44
        $region43: #{tpu_custom_call.1} parent=27 // pred_region
          %s461 = sadd.s32 %s32, %s33
          %s463 = ssub.s32 128, 128
          %464 = vsyncadd %s433, %s463
          %s465 = smul.addr %s31, 2
          %s466 = sadd.s32 %s461, %s465
          %s467 = smul.addr %s466, 128
          %s468 = scalar_lea.hbm %s2, %s467
          %s470 = sshll.u32 %s436, 4
          %s471 = int_to_ptr.vmem [resolvable:$true] %s470
          %473 = dma.vmem_to_hbm [thread:$0]  %s471, 128, %s468, %s433
        $region44: #{tpu_custom_call.1} parent=27 // pred_fallthru
          _
        // Predicated region
        $region45: #{tpu_custom_call.1} parent=27 // pred_check
          %p474 = pneg %p155
        $region46: #{tpu_custom_call.1} parent=27 // pred_check_branch
          %476 = sbr.rel (%p474) target = $region48
        $region47: #{tpu_custom_call.1} parent=27 // pred_region
          _
        $region48: #{tpu_custom_call.1} parent=27 // pred_fallthru
          _
        // Predicated region
        $region49: #{tpu_custom_call.1} parent=27 // pred_check
          %p477 = pneg %p183
        $region50: #{tpu_custom_call.1} parent=27 // pred_check_branch
          %479 = sbr.rel (%p477) target = $region52
        $region51: #{tpu_custom_call.1} parent=27 // pred_region
          _
        $region52: #{tpu_custom_call.1} parent=27 // pred_fallthru
          _
        // Predicated region
        $region53: #{tpu_custom_call.1} parent=27 // pred_check
          %p480 = pneg %p211
        $region54: #{tpu_custom_call.1} parent=27 // pred_check_branch
          %482 = sbr.rel (%p480) target = $region56
        $region55: #{tpu_custom_call.1} parent=27 // pred_region
          _
        $region56: #{tpu_custom_call.1} parent=27 // pred_fallthru
          _
      $region28: #{tpu_custom_call.1} parent=5 // pred_fallthru
        _
      %p483 = scmp.le.s32.totalorder 2, %s21
      // Predicated region
      $region57: #{tpu_custom_call.1} parent=5 // pred_check
        %p484 = pneg %p483
      $region58: #{tpu_custom_call.1} parent=5 // pred_check_branch
        %486 = sbr.rel (%p484) target = $region60
      $region59: #{tpu_custom_call.1} parent=5 // pred_region
        %s487 = ssub.s32 %s21, 2
        // Predicated region
        $region61: #{tpu_custom_call.1} parent=59 // pred_check
          %p488 = pneg %p133
        $region62: #{tpu_custom_call.1} parent=59 // pred_check_branch
          %490 = sbr.rel (%p488) target = $region64
        $region63: #{tpu_custom_call.1} parent=59 // pred_region
          %s491 = sand.u32 %s118, 1
          %s492 = scalar_lea.sflag [#allocation4], %s491
          %s493 = sand.u32 %s118, 1
          %s494 = smul.addr %s493, 8
          %s495 = scalar_lea.vmem [#allocation7], %s494
          %496 = dma.done %s492, 128
        $region64: #{tpu_custom_call.1} parent=59 // pred_fallthru
          _
        // Predicated region
        $region65: #{tpu_custom_call.1} parent=59 // pred_check
          %p497 = pneg %p161
        $region66: #{tpu_custom_call.1} parent=59 // pred_check_branch
          %499 = sbr.rel (%p497) target = $region68
        $region67: #{tpu_custom_call.1} parent=59 // pred_region
          %p500 = scmp.lt.s32.totalorder %s35, 1
          %s501 = scalar_select %p500, %s35, 1
          %p502 = scmp.lt.s32.totalorder %s34, 0
          %s503 = scalar_select %p502, %s34, 0
          %s504 = sadd.s32 %s503, %s501
          %s505 = smul.addr %s504, 8
          %s506 = scalar_lea.vmem %s3, %s505
        $region68: #{tpu_custom_call.1} parent=59 // pred_fallthru
          _
        // Predicated region
        $region69: #{tpu_custom_call.1} parent=59 // pred_check
          %p507 = pneg %p189
        $region70: #{tpu_custom_call.1} parent=59 // pred_check_branch
          %509 = sbr.rel (%p507) target = $region72
        $region71: #{tpu_custom_call.1} parent=59 // pred_region
          %p510 = scmp.lt.s32.totalorder %s35, 1
          %s511 = scalar_select %p510, %s35, 1
          %p512 = scmp.lt.s32.totalorder %s34, 0
          %s513 = scalar_select %p512, %s34, 0
          %s514 = sadd.s32 %s513, %s511
          %s515 = smul.addr %s514, 8
          %s516 = scalar_lea.vmem %s4, %s515
        $region72: #{tpu_custom_call.1} parent=59 // pred_fallthru
          _
        // Predicated region
        $region73: #{tpu_custom_call.1} parent=59 // pred_check
          %p517 = pneg %p217
        $region74: #{tpu_custom_call.1} parent=59 // pred_check_branch
          %519 = sbr.rel (%p517) target = $region76
        $region75: #{tpu_custom_call.1} parent=59 // pred_region
          %p520 = scmp.lt.s32.totalorder %s35, 1
          %s521 = scalar_select %p520, %s35, 1
          %p522 = scmp.lt.s32.totalorder %s34, 0
          %s523 = scalar_select %p522, %s34, 0
          %s524 = sadd.s32 %s523, %s521
          %s525 = smul.addr %s524, 8
          %s526 = scalar_lea.vmem %s5, %s525
        $region76: #{tpu_custom_call.1} parent=59 // pred_fallthru
          _
      $region60: #{tpu_custom_call.1} parent=5 // pred_fallthru
        _
    $region6: #{tpu_custom_call.1} parent=1 // loop_footer
      %s25 = sadd.s32 1, %s21
    $region7: #{tpu_custom_call.1} parent=1 // loop_footer_branch
      %20 = sbr.rel target = $region3
    $region8: #{tpu_custom_call.1} parent=1 // loop_exit
      _
    %527 = vsyncpa [#allocation3], 1
    %s528 = scalar_lea.sflag [#allocation3], 1
    %529 = vsyncpa %s528, 1
    %530 = vsyncpa [#allocation6], 1
    %s531 = scalar_lea.sflag [#allocation6], 1
    %532 = vsyncpa %s531, 1
    %533 = vsyncpa [#allocation4], 1
    %s534 = scalar_lea.sflag [#allocation4], 1
    %535 = vsyncpa %s534, 1

</llo_original>
